<compile_context>
chip_gen: v7x
topology: tpu7x:2x2x1
jax: 0.10.0
libtpu: 0.0.40
codegen_flags: <defaults>
</compile_context>

<pallas_src>
import jax
import jax.numpy as jnp
from jax.experimental import pallas as pl
from jax.experimental.pallas import tpu as pltpu

# ----------------------------- config -----------------------------
WIDTH = 32
DEPTH = 4
STRIDE = 2
N_BLOCKS = DEPTH // STRIDE          # 2 ResBlocks
N_LAYERS = N_BLOCKS * STRIDE        # 4 linear layers total
BATCH = 16

LANES = 128                         # TPU lane width
REP = LANES // WIDTH                # 4 batch rows packed per 128-lane row


# ----------------------------- kernel -----------------------------
def resnet_kernel(x_ref, w_ref, b_ref, o_ref):
    """Lane-dense packed layout.

    x_ref/o_ref: (ROWS, 128) -- each row packs REP=4 consecutive batch rows of width 32.
    w_ref:       (N_LAYERS, 128, 128) -- block-diagonal weights, (in, out) layout.
    b_ref:       (N_LAYERS, 1, 128)   -- biases tiled across the 4 packed 32-chunks.
    """
    h = x_ref[...].astype(jnp.float32)
    layer = 0
    for _blk in range(N_BLOCKS):
        residual = h
        for _l in range(STRIDE):
            # y = h @ W (block-diag, pre-transposed) + b ; equivalent per 32-chunk to
            # nn.Linear (x @ W.T + b), then Tanh.
            h = jnp.tanh(
                jnp.dot(h, w_ref[layer], preferred_element_type=jnp.float32)
                + b_ref[layer])
            layer += 1
        h = h + residual                           # ResBlock residual add
    o_ref[...] = h.astype(o_ref.dtype)


# ----------------------------- wrapper -----------------------------
def _pack_params(weights, biases):
    """weights: (L, WIDTH, WIDTH) torch layout (out, in); biases: (L, WIDTH).

    Returns lane-dense packed params:
      w_bd:    (L, 128, 128) block-diagonal, (in, out) layout
      b_tiled: (L, 1, 128)
    One-time wrapper-side layout plumbing (outside the kernel).
    """
    w_t = jnp.transpose(weights, (0, 2, 1))                    # (L, in, out)
    eye = jnp.eye(REP, dtype=weights.dtype)                    # (REP, REP)
    w_bd = jnp.einsum('rs,lio->lriso', eye, w_t).reshape(N_LAYERS, LANES, LANES)
    b_tiled = jnp.tile(biases[:, None, :], (1, 1, REP))        # (L, 1, 128)
    return w_bd, b_tiled


def resnet_forward(x, weights, biases):
    n, width = x.shape
    assert width == WIDTH
    assert (n * width) % LANES == 0, "batch*width must pack into 128-lane rows"
    rows = (n * width) // LANES

    w_bd, b_tiled = _pack_params(weights, biases)
    x_flat = x.reshape(rows, LANES)                            # lane-dense input slab

    # Single grid step: everything (weights + activations) is resident in VMEM; no
    # pipelining needed at this size. For much larger batches, tile `rows` instead and
    # keep the (constant-index) weight/bias blocks resident across steps.
    out_flat = pl.pallas_call(
        resnet_kernel,
        out_shape=jax.ShapeDtypeStruct((rows, LANES), x.dtype),
        grid_spec=pltpu.PrefetchScalarGridSpec(
            num_scalar_prefetch=0,
            grid=(1,),
            in_specs=[
                pl.BlockSpec((rows, LANES), lambda i: (0, 0)),
                pl.BlockSpec((N_LAYERS, LANES, LANES), lambda i: (0, 0, 0)),
                pl.BlockSpec((N_LAYERS, 1, LANES), lambda i: (0, 0, 0)),
            ],
            out_specs=pl.BlockSpec((rows, LANES), lambda i: (0, 0)),
        ),
        compiler_params=pltpu.CompilerParams(
            dimension_semantics=("arbitrary",)),
    )(x_flat, w_bd, b_tiled)

    return out_flat.reshape(n, width)


# ------------------------- reference (pure JAX) -------------------------
def resnet_reference(x, weights, biases):
    h = x.astype(jnp.float32)
    layer = 0
    for _blk in range(N_BLOCKS):
        residual = h
        for _l in range(STRIDE):
            h = jnp.tanh(h @ weights[layer].T + biases[layer])
            layer += 1
        h = h + residual
    return h.astype(x.dtype)


# ----------------------------- main -----------------------------
if __name__ == "__main__":
    key = jax.random.PRNGKey(0)
    kx, kw, kb = jax.random.split(key, 3)

    x = jax.random.normal(kx, (BATCH, WIDTH), dtype=jnp.float32)
    # Parameters in torch.nn.Linear layout: W (out, in), b (out,)
    bound = 1.0 / (WIDTH ** 0.5)
    weights = jax.random.uniform(
        kw, (N_LAYERS, WIDTH, WIDTH), dtype=jnp.float32, minval=-bound, maxval=bound)
    biases = jax.random.uniform(
        kb, (N_LAYERS, WIDTH), dtype=jnp.float32, minval=-bound, maxval=bound)

    out = resnet_forward(x, weights, biases)
    out = jax.block_until_ready(out)

    ref = resnet_reference(x, weights, biases)
    assert out.shape == (BATCH, WIDTH)
    assert jnp.allclose(out, ref, atol=1e-5, rtol=1e-5), "mismatch vs reference"

    print("KERNEL_OK")
</pallas_src>

<mosaic_0001>
module attributes {stable_mosaic.version = 11 : i64} {
  func.func @resnet_kernel(%arg0: i32, %arg1: memref<4x128xf32, #tpu.memory_space<vmem>>, %arg2: memref<4x128x128xf32, #tpu.memory_space<vmem>>, %arg3: memref<4x1x128xf32, #tpu.memory_space<vmem>>, %arg4: memref<4x128xf32, #tpu.memory_space<vmem>>) attributes {dimension_semantics = [#tpu.dimension_semantics<arbitrary>], iteration_bounds = array<i64: 1>, scalar_prefetch = 0 : i64, scratch_operands = 0 : i64, tpu.core_type = #tpu.core_type<tc>, window_params = [{pipeline_mode = #tpu.pipeline_mode<synchronous>, transform_indices = @transform_0, window_bounds = array<i64: 4, 128>}, {pipeline_mode = #tpu.pipeline_mode<synchronous>, transform_indices = @transform_1, window_bounds = array<i64: 4, 128, 128>}, {pipeline_mode = #tpu.pipeline_mode<synchronous>, transform_indices = @transform_2, window_bounds = array<i64: 4, 1, 128>}, {pipeline_mode = #tpu.pipeline_mode<synchronous>, transform_indices = @transform_3, window_bounds = array<i64: 4, 128>}]} {
    %c0 = arith.constant 0 : index
    %c0_0 = arith.constant 0 : index
    %0 = vector.load %arg1[%c0, %c0_0] : memref<4x128xf32, #tpu.memory_space<vmem>>, vector<4x128xf32>
    %c0_1 = arith.constant 0 : index
    %c0_2 = arith.constant 0 : index
    %c0_3 = arith.constant 0 : index
    %1 = vector.load %arg2[%c0_1, %c0_2, %c0_3] : memref<4x128x128xf32, #tpu.memory_space<vmem>>, vector<1x128x128xf32>
    %2 = vector.shape_cast %1 : vector<1x128x128xf32> to vector<128x128xf32>
    %cst = arith.constant dense<0.000000e+00> : vector<4x128xf32>
    %3 = tpu.matmul %0, %2, %cst {dimension_numbers = #tpu.dot_dimension_numbers<[1], [0], [0], [1], [0, 0, 1, 1], [], []>} : vector<4x128xf32>, vector<128x128xf32>, vector<4x128xf32> -> vector<4x128xf32>
    %c0_4 = arith.constant 0 : index
    %c0_5 = arith.constant 0 : index
    %c0_6 = arith.constant 0 : index
    %4 = vector.load %arg3[%c0_4, %c0_5, %c0_6] : memref<4x1x128xf32, #tpu.memory_space<vmem>>, vector<1x1x128xf32>
    %5 = vector.shape_cast %4 : vector<1x1x128xf32> to vector<1x128xf32>
    %6 = vector.broadcast %5 : vector<1x128xf32> to vector<4x128xf32>
    %7 = arith.addf %3, %6 : vector<4x128xf32>
    %8 = math.tanh %7 : vector<4x128xf32>
    %c1 = arith.constant 1 : index
    %c0_7 = arith.constant 0 : index
    %c0_8 = arith.constant 0 : index
    %9 = vector.load %arg2[%c1, %c0_7, %c0_8] : memref<4x128x128xf32, #tpu.memory_space<vmem>>, vector<1x128x128xf32>
    %10 = vector.shape_cast %9 : vector<1x128x128xf32> to vector<128x128xf32>
    %cst_9 = arith.constant dense<0.000000e+00> : vector<4x128xf32>
    %11 = tpu.matmul %8, %10, %cst_9 {dimension_numbers = #tpu.dot_dimension_numbers<[1], [0], [0], [1], [0, 0, 1, 1], [], []>} : vector<4x128xf32>, vector<128x128xf32>, vector<4x128xf32> -> vector<4x128xf32>
    %c1_10 = arith.constant 1 : index
    %c0_11 = arith.constant 0 : index
    %c0_12 = arith.constant 0 : index
    %12 = vector.load %arg3[%c1_10, %c0_11, %c0_12] : memref<4x1x128xf32, #tpu.memory_space<vmem>>, vector<1x1x128xf32>
    %13 = vector.shape_cast %12 : vector<1x1x128xf32> to vector<1x128xf32>
    %14 = vector.broadcast %13 : vector<1x128xf32> to vector<4x128xf32>
    %15 = arith.addf %11, %14 : vector<4x128xf32>
    %16 = math.tanh %15 : vector<4x128xf32>
    %17 = arith.addf %16, %0 : vector<4x128xf32>
    %c2 = arith.constant 2 : index
    %c0_13 = arith.constant 0 : index
    %c0_14 = arith.constant 0 : index
    %18 = vector.load %arg2[%c2, %c0_13, %c0_14] : memref<4x128x128xf32, #tpu.memory_space<vmem>>, vector<1x128x128xf32>
    %19 = vector.shape_cast %18 : vector<1x128x128xf32> to vector<128x128xf32>
    %cst_15 = arith.constant dense<0.000000e+00> : vector<4x128xf32>
    %20 = tpu.matmul %17, %19, %cst_15 {dimension_numbers = #tpu.dot_dimension_numbers<[1], [0], [0], [1], [0, 0, 1, 1], [], []>} : vector<4x128xf32>, vector<128x128xf32>, vector<4x128xf32> -> vector<4x128xf32>
    %c2_16 = arith.constant 2 : index
    %c0_17 = arith.constant 0 : index
    %c0_18 = arith.constant 0 : index
    %21 = vector.load %arg3[%c2_16, %c0_17, %c0_18] : memref<4x1x128xf32, #tpu.memory_space<vmem>>, vector<1x1x128xf32>
    %22 = vector.shape_cast %21 : vector<1x1x128xf32> to vector<1x128xf32>
    %23 = vector.broadcast %22 : vector<1x128xf32> to vector<4x128xf32>
    %24 = arith.addf %20, %23 : vector<4x128xf32>
    %25 = math.tanh %24 : vector<4x128xf32>
    %c3 = arith.constant 3 : index
    %c0_19 = arith.constant 0 : index
    %c0_20 = arith.constant 0 : index
    %26 = vector.load %arg2[%c3, %c0_19, %c0_20] : memref<4x128x128xf32, #tpu.memory_space<vmem>>, vector<1x128x128xf32>
    %27 = vector.shape_cast %26 : vector<1x128x128xf32> to vector<128x128xf32>
    %cst_21 = arith.constant dense<0.000000e+00> : vector<4x128xf32>
    %28 = tpu.matmul %25, %27, %cst_21 {dimension_numbers = #tpu.dot_dimension_numbers<[1], [0], [0], [1], [0, 0, 1, 1], [], []>} : vector<4x128xf32>, vector<128x128xf32>, vector<4x128xf32> -> vector<4x128xf32>
    %c3_22 = arith.constant 3 : index
    %c0_23 = arith.constant 0 : index
    %c0_24 = arith.constant 0 : index
    %29 = vector.load %arg3[%c3_22, %c0_23, %c0_24] : memref<4x1x128xf32, #tpu.memory_space<vmem>>, vector<1x1x128xf32>
    %30 = vector.shape_cast %29 : vector<1x1x128xf32> to vector<1x128xf32>
    %31 = vector.broadcast %30 : vector<1x128xf32> to vector<4x128xf32>
    %32 = arith.addf %28, %31 : vector<4x128xf32>
    %33 = math.tanh %32 : vector<4x128xf32>
    %34 = arith.addf %33, %17 : vector<4x128xf32>
    %c0_25 = arith.constant 0 : index
    %c0_26 = arith.constant 0 : index
    %35 = vector.load %arg4[%c0_25, %c0_26] : memref<4x128xf32, #tpu.memory_space<vmem>>, vector<4x128xf32>
    tpu.vector_store %arg4[%c0_25, %c0_26], %34 {strides = array<i32>} : memref<4x128xf32, #tpu.memory_space<vmem>>, vector<4x128xf32>,
    return
  }
  func.func @transform_0(%arg0: i32) -> (i32, i32) {
    %c0_i32 = arith.constant 0 : i32
    %c0_i32_0 = arith.constant 0 : i32
    %c0_i32_1 = arith.constant 0 : i32
    return %c0_i32, %c0_i32_0 : i32, i32
  }
  func.func @transform_1(%arg0: i32) -> (i32, i32, i32) {
    %c0_i32 = arith.constant 0 : i32
    %c0_i32_0 = arith.constant 0 : i32
    %c0_i32_1 = arith.constant 0 : i32
    %c0_i32_2 = arith.constant 0 : i32
    return %c0_i32, %c0_i32_0, %c0_i32_1 : i32, i32, i32
  }
  func.func @transform_2(%arg0: i32) -> (i32, i32, i32) {
    %c0_i32 = arith.constant 0 : i32
    %c0_i32_0 = arith.constant 0 : i32
    %c0_i32_1 = arith.constant 0 : i32
    %c0_i32_2 = arith.constant 0 : i32
    return %c0_i32, %c0_i32_0, %c0_i32_1 : i32, i32, i32
  }
  func.func @transform_3(%arg0: i32) -> (i32, i32) {
    %c0_i32 = arith.constant 0 : i32
    %c0_i32_0 = arith.constant 0 : i32
    %c0_i32_1 = arith.constant 0 : i32
    return %c0_i32, %c0_i32_0 : i32, i32
  }
}

</mosaic_0001>

<llo_original>
// kernel: tpu_custom_call.1
$region0: #{tpu_custom_call.1}
  #allocation0 [shape = 'u32[]', space=smem, size = 0x4, offset = 0x4, fixed_abs, tag = 'smem constant byte address 0x4 - core index']
  #allocation1 [shape = 'u32[144,128]{1,0:T(1,128)}', space=vmem, size = 0x12000, scoped, tag = 'internal scratch']
  %s0 = inlined_call_operand.hbm [shape: f32[4,128], index: 0, kind: input, shape index: {}]
  %s1 = inlined_call_operand.hbm [shape: f32[4,128,128], index: 1, kind: input, shape index: {}]
  %s2 = inlined_call_operand.vmem [shape: f32[4,1,128], index: 2, kind: input, shape index: {}]
  %s3 = inlined_call_operand.hbm [shape: f32[4,128], index: 3, kind: output, shape index: {}]
  %s4 = sld [smem:[#allocation0]]
  $region30: #{tpu_custom_call.1} parent=0
    _
  %s6 = ssub.s32 1, %s4
  %s7 = scalar_select 0, %s6, %s4
  $region1: #{tpu_custom_call.1} parent=0
    #allocation2 [shape = 'u8[2048]{0}', space=vmem, size = 0x800, scoped, tag = 'input window, operand 0, single buffered']
    #allocation3 [shape = 's32[1]{0}', space=sflag, size = 0x4, scoped, tag = 'scoped memory for tpu_custom_call.1']
    #allocation4 [shape = 's32[1]{0}', space=sflag, size = 0x4, scoped, tag = 'scoped memory for tpu_custom_call.1']
    #allocation5 [shape = 'u8[262144]{0}', space=vmem, size = 0x40000, scoped, tag = 'input window, operand 1, single buffered']
    #allocation6 [shape = 's32[1]{0}', space=sflag, size = 0x4, scoped, tag = 'scoped memory for tpu_custom_call.1']
    #allocation7 [shape = 'u8[2048]{0}', space=vmem, size = 0x800, scoped, tag = 'output window, operand 0, single buffered']
    %8 = vsyncpa [#allocation3], 0
    %9 = vsyncpa [#allocation6], 0
    %10 = vsyncpa [#allocation4], 0
    // Predicated region
    $region2: #{tpu_custom_call.1} parent=1 // pred_check
      _
    $region3: #{tpu_custom_call.1} parent=1 // pred_check_branch
      %12 = sbr.rel (0) target = $region5
    $region4: #{tpu_custom_call.1} parent=1 // pred_region
      %s14 = ssub.s32 64, 64
      %15 = vsyncadd [#allocation3], %s14
      %s17 = sshll.u32 [#allocation2], 4
      %s18 = int_to_ptr.vmem [resolvable:$true] %s17
      %20 = dma.hbm_to_vmem [thread:$0]  %s0, 64, %s18, [#allocation3]
    $region5: #{tpu_custom_call.1} parent=1 // pred_fallthru
      _
    // Predicated region
    $region6: #{tpu_custom_call.1} parent=1 // pred_check
      _
    $region7: #{tpu_custom_call.1} parent=1 // pred_check_branch
      %22 = sbr.rel (0) target = $region9
    $region8: #{tpu_custom_call.1} parent=1 // pred_region
      %s24 = ssub.s32 8192, 8192
      %25 = vsyncadd [#allocation6], %s24
      %s26 = sshll.u32 [#allocation5], 4
      %s27 = int_to_ptr.vmem [resolvable:$true] %s26
      %32 = dma.hbm_to_vmem [thread:$0]  %s1, 8192, %s27, [#allocation6], 128, 128, 8
    $region9: #{tpu_custom_call.1} parent=1 // pred_fallthru
      _
    // Predicated region
    $region10: #{tpu_custom_call.1} parent=1 // pred_check
      _
    $region11: #{tpu_custom_call.1} parent=1 // pred_check_branch
      %34 = sbr.rel (0) target = $region13
    $region12: #{tpu_custom_call.1} parent=1 // pred_region
      _
    $region13: #{tpu_custom_call.1} parent=1 // pred_fallthru
      _
    // Predicated region
    $region14: #{tpu_custom_call.1} parent=1 // pred_check
      _
    $region15: #{tpu_custom_call.1} parent=1 // pred_check_branch
      %36 = sbr.rel (0) target = $region17
    $region16: #{tpu_custom_call.1} parent=1 // pred_region
      %37 = dma.done [#allocation3], 64
    $region17: #{tpu_custom_call.1} parent=1 // pred_fallthru
      _
    // Predicated region
    $region18: #{tpu_custom_call.1} parent=1 // pred_check
      _
    $region19: #{tpu_custom_call.1} parent=1 // pred_check_branch
      %39 = sbr.rel (0) target = $region21
    $region20: #{tpu_custom_call.1} parent=1 // pred_region
      %40 = dma.done [#allocation6], 8192
    $region21: #{tpu_custom_call.1} parent=1 // pred_fallthru
      _
    %v41 = vld [vmem:[#allocation2] sm:$0xf]
    %v42 = vld [vmem:[#allocation5] sm:$0xff]
    %v43 = vld [vmem:[#allocation5 + $0x8] sm:$0xff]
    %v44 = vld [vmem:[#allocation5 + $0x10] sm:$0xff]
    %v45 = vld [vmem:[#allocation5 + $0x18] sm:$0xff]
    %v46 = vld [vmem:[#allocation5 + $0x20] sm:$0xff]
    %v47 = vld [vmem:[#allocation5 + $0x28] sm:$0xff]
    %v48 = vld [vmem:[#allocation5 + $0x30] sm:$0xff]
    %v49 = vld [vmem:[#allocation5 + $0x38] sm:$0xff]
    %v50 = vld [vmem:[#allocation5 + $0x40] sm:$0xff]
    %v51 = vld [vmem:[#allocation5 + $0x48] sm:$0xff]
    %v52 = vld [vmem:[#allocation5 + $0x50] sm:$0xff]
    %v53 = vld [vmem:[#allocation5 + $0x58] sm:$0xff]
    %v54 = vld [vmem:[#allocation5 + $0x60] sm:$0xff]
    %v55 = vld [vmem:[#allocation5 + $0x68] sm:$0xff]
    %v56 = vld [vmem:[#allocation5 + $0x70] sm:$0xff]
    %v57 = vld [vmem:[#allocation5 + $0x78] sm:$0xff]
    %v58 = vld [vmem:[%s2] sm:$0x1]
    %v60 = vlaneseq
    %v61 = vshrl.u32 %v60, 7
    %v62 = vsub.s32 0, %v61
    %v63 = vrot.slane %v58, %v62
    %65 = vmatprep.subr.mxu0 0.0
    %66 = vmatpush1.msra.mxu0 %v42
    %67 = vmatprep.subr.mxu0 0.0
    %68 = vmatpush1.msra.mxu0 %v43
    %69 = vmatprep.subr.mxu0 0.0
    %70 = vmatpush1.msra.mxu0 %v44
    %71 = vmatprep.subr.mxu0 0.0
    %72 = vmatpush1.msra.mxu0 %v45
    %73 = vmatprep.subr.mxu0 0.0
    %74 = vmatpush1.msra.mxu0 %v46
    %75 = vmatprep.subr.mxu0 0.0
    %76 = vmatpush1.msra.mxu0 %v47
    %77 = vmatprep.subr.mxu0 0.0
    %78 = vmatpush1.msra.mxu0 %v48
    %79 = vmatprep.subr.mxu0 0.0
    %80 = vmatpush1.msra.mxu0 %v49
    %81 = vmatprep.subr.mxu0 0.0
    %82 = vmatpush1.msra.mxu0 %v50
    %83 = vmatprep.subr.mxu0 0.0
    %84 = vmatpush1.msra.mxu0 %v51
    %85 = vmatprep.subr.mxu0 0.0
    %86 = vmatpush1.msra.mxu0 %v52
    %87 = vmatprep.subr.mxu0 0.0
    %88 = vmatpush1.msra.mxu0 %v53
    %89 = vmatprep.subr.mxu0 0.0
    %90 = vmatpush1.msra.mxu0 %v54
    %91 = vmatprep.subr.mxu0 0.0
    %92 = vmatpush1.msra.mxu0 %v55
    %93 = vmatprep.subr.mxu0 0.0
    %94 = vmatpush1.msra.mxu0 %v56
    %95 = vmatprep.subr.mxu0 0.0
    %96 = vmatpush1.msra.mxu0 %v57
    %97 = vmatprep.subr.mxu0 0.0
    %98 = vmatpush1.msra.mxu0 0.0
    %99 = vmatprep.subr.mxu0 0.0
    %100 = vmatpush1.msra.mxu0 0.0
    %101 = vmatprep.subr.mxu0 0.0
    %102 = vmatpush1.msra.mxu0 0.0
    %103 = vmatprep.subr.mxu0 0.0
    %104 = vmatpush1.msra.mxu0 0.0
    %105 = vmatprep.subr.mxu0 0.0
    %106 = vmatpush1.msra.mxu0 0.0
    %107 = vmatprep.subr.mxu0 0.0
    %108 = vmatpush1.msra.mxu0 0.0
    %109 = vmatprep.subr.mxu0 0.0
    %110 = vmatpush1.msra.mxu0 0.0
    %111 = vmatprep.subr.mxu0 0.0
    %112 = vmatpush1.msra.mxu0 0.0
    %113 = vmatprep.subr.mxu0 0.0
    %114 = vmatpush1.msra.mxu0 0.0
    %115 = vmatprep.subr.mxu0 0.0
    %116 = vmatpush1.msra.mxu0 0.0
    %117 = vmatprep.subr.mxu0 0.0
    %118 = vmatpush1.msra.mxu0 0.0
    %119 = vmatprep.subr.mxu0 0.0
    %120 = vmatpush1.msra.mxu0 0.0
    %121 = vmatprep.subr.mxu0 0.0
    %122 = vmatpush1.msra.mxu0 0.0
    %123 = vmatprep.subr.mxu0 0.0
    %124 = vmatpush1.msra.mxu0 0.0
    %125 = vmatprep.subr.mxu0 0.0
    %126 = vmatpush1.msra.mxu0 0.0
    %127 = vmatprep.subr.mxu0 0.0
    %128 = vmatpush1.msra.mxu0 0.0
    %129 = vmatprep.mubr.f32.mxu0 0.0
    %130 = vmatmul.mubr.f32.gmra.mrb[0].mxu0 %v41
    %v131 = vpop.f32.mrb[0].mxu0
    %v132 = vadd.f32 %v63, %v131
    %v133 = vpop.f32.mrb[0].mxu0
    %134 = vdwg.mxu0
    %v135 = vtanh.pop %v132
    %s136 = scalar_lea.vmem [#allocation5], 128
    %v137 = vld [vmem:[%s136] sm:$0xff]
    %v138 = vld [vmem:[%s136 + $0x8] sm:$0xff]
    %v139 = vld [vmem:[%s136 + $0x10] sm:$0xff]
    %v140 = vld [vmem:[%s136 + $0x18] sm:$0xff]
    %v141 = vld [vmem:[%s136 + $0x20] sm:$0xff]
    %v142 = vld [vmem:[%s136 + $0x28] sm:$0xff]
    %v143 = vld [vmem:[%s136 + $0x30] sm:$0xff]
    %v144 = vld [vmem:[%s136 + $0x38] sm:$0xff]
    %v145 = vld [vmem:[%s136 + $0x40] sm:$0xff]
    %v146 = vld [vmem:[%s136 + $0x48] sm:$0xff]
    %v147 = vld [vmem:[%s136 + $0x50] sm:$0xff]
    %v148 = vld [vmem:[%s136 + $0x58] sm:$0xff]
    %v149 = vld [vmem:[%s136 + $0x60] sm:$0xff]
    %v150 = vld [vmem:[%s136 + $0x68] sm:$0xff]
    %v151 = vld [vmem:[%s136 + $0x70] sm:$0xff]
    %v152 = vld [vmem:[%s136 + $0x78] sm:$0xff]
    %s153 = scalar_lea.vmem %s2, 1
    %v154 = vld [vmem:[%s153] sm:$0x1]
    %v156 = vlaneseq
    %v157 = vshrl.u32 %v156, 7
    %v158 = vsub.s32 0, %v157
    %v159 = vrot.slane %v154, %v158
    %161 = vmatprep.subr.mxu0 0.0
    %162 = vmatpush1.msra.mxu0 %v137
    %163 = vmatprep.subr.mxu0 0.0
    %164 = vmatpush1.msra.mxu0 %v138
    %165 = vmatprep.subr.mxu0 0.0
    %166 = vmatpush1.msra.mxu0 %v139
    %167 = vmatprep.subr.mxu0 0.0
    %168 = vmatpush1.msra.mxu0 %v140
    %169 = vmatprep.subr.mxu0 0.0
    %170 = vmatpush1.msra.mxu0 %v141
    %171 = vmatprep.subr.mxu0 0.0
    %172 = vmatpush1.msra.mxu0 %v142
    %173 = vmatprep.subr.mxu0 0.0
    %174 = vmatpush1.msra.mxu0 %v143
    %175 = vmatprep.subr.mxu0 0.0
    %176 = vmatpush1.msra.mxu0 %v144
    %177 = vmatprep.subr.mxu0 0.0
    %178 = vmatpush1.msra.mxu0 %v145
    %179 = vmatprep.subr.mxu0 0.0
    %180 = vmatpush1.msra.mxu0 %v146
    %181 = vmatprep.subr.mxu0 0.0
    %182 = vmatpush1.msra.mxu0 %v147
    %183 = vmatprep.subr.mxu0 0.0
    %184 = vmatpush1.msra.mxu0 %v148
    %185 = vmatprep.subr.mxu0 0.0
    %186 = vmatpush1.msra.mxu0 %v149
    %187 = vmatprep.subr.mxu0 0.0
    %188 = vmatpush1.msra.mxu0 %v150
    %189 = vmatprep.subr.mxu0 0.0
    %190 = vmatpush1.msra.mxu0 %v151
    %191 = vmatprep.subr.mxu0 0.0
    %192 = vmatpush1.msra.mxu0 %v152
    %193 = vmatprep.subr.mxu0 0.0
    %194 = vmatpush1.msra.mxu0 0.0
    %195 = vmatprep.subr.mxu0 0.0
    %196 = vmatpush1.msra.mxu0 0.0
    %197 = vmatprep.subr.mxu0 0.0
    %198 = vmatpush1.msra.mxu0 0.0
    %199 = vmatprep.subr.mxu0 0.0
    %200 = vmatpush1.msra.mxu0 0.0
    %201 = vmatprep.subr.mxu0 0.0
    %202 = vmatpush1.msra.mxu0 0.0
    %203 = vmatprep.subr.mxu0 0.0
    %204 = vmatpush1.msra.mxu0 0.0
    %205 = vmatprep.subr.mxu0 0.0
    %206 = vmatpush1.msra.mxu0 0.0
    %207 = vmatprep.subr.mxu0 0.0
    %208 = vmatpush1.msra.mxu0 0.0
    %209 = vmatprep.subr.mxu0 0.0
    %210 = vmatpush1.msra.mxu0 0.0
    %211 = vmatprep.subr.mxu0 0.0
    %212 = vmatpush1.msra.mxu0 0.0
    %213 = vmatprep.subr.mxu0 0.0
    %214 = vmatpush1.msra.mxu0 0.0
    %215 = vmatprep.subr.mxu0 0.0
    %216 = vmatpush1.msra.mxu0 0.0
    %217 = vmatprep.subr.mxu0 0.0
    %218 = vmatpush1.msra.mxu0 0.0
    %219 = vmatprep.subr.mxu0 0.0
    %220 = vmatpush1.msra.mxu0 0.0
    %221 = vmatprep.subr.mxu0 0.0
    %222 = vmatpush1.msra.mxu0 0.0
    %223 = vmatprep.subr.mxu0 0.0
    %224 = vmatpush1.msra.mxu0 0.0
    %225 = vmatprep.mubr.f32.mxu0 0.0
    %226 = vmatmul.mubr.f32.gmra.mrb[0].mxu0 %v135
    %v227 = vpop.f32.mrb[0].mxu0
    %v228 = vadd.f32 %v159, %v227
    %v229 = vpop.f32.mrb[0].mxu0
    %230 = vdwg.mxu0
    %v231 = vtanh.pop %v228
    %v232 = vadd.f32 %v231, %v41
    %s233 = scalar_lea.vmem [#allocation5], 256
    %v234 = vld [vmem:[%s233] sm:$0xff]
    %v235 = vld [vmem:[%s233 + $0x8] sm:$0xff]
    %v236 = vld [vmem:[%s233 + $0x10] sm:$0xff]
    %v237 = vld [vmem:[%s233 + $0x18] sm:$0xff]
    %v238 = vld [vmem:[%s233 + $0x20] sm:$0xff]
    %v239 = vld [vmem:[%s233 + $0x28] sm:$0xff]
    %v240 = vld [vmem:[%s233 + $0x30] sm:$0xff]
    %v241 = vld [vmem:[%s233 + $0x38] sm:$0xff]
    %v242 = vld [vmem:[%s233 + $0x40] sm:$0xff]
    %v243 = vld [vmem:[%s233 + $0x48] sm:$0xff]
    %v244 = vld [vmem:[%s233 + $0x50] sm:$0xff]
    %v245 = vld [vmem:[%s233 + $0x58] sm:$0xff]
    %v246 = vld [vmem:[%s233 + $0x60] sm:$0xff]
    %v247 = vld [vmem:[%s233 + $0x68] sm:$0xff]
    %v248 = vld [vmem:[%s233 + $0x70] sm:$0xff]
    %v249 = vld [vmem:[%s233 + $0x78] sm:$0xff]
    %s250 = scalar_lea.vmem %s2, 2
    %v251 = vld [vmem:[%s250] sm:$0x1]
    %v253 = vlaneseq
    %v254 = vshrl.u32 %v253, 7
    %v255 = vsub.s32 0, %v254
    %v256 = vrot.slane %v251, %v255
    %258 = vmatprep.subr.mxu0 0.0
    %259 = vmatpush1.msra.mxu0 %v234
    %260 = vmatprep.subr.mxu0 0.0
    %261 = vmatpush1.msra.mxu0 %v235
    %262 = vmatprep.subr.mxu0 0.0
    %263 = vmatpush1.msra.mxu0 %v236
    %264 = vmatprep.subr.mxu0 0.0
    %265 = vmatpush1.msra.mxu0 %v237
    %266 = vmatprep.subr.mxu0 0.0
    %267 = vmatpush1.msra.mxu0 %v238
    %268 = vmatprep.subr.mxu0 0.0
    %269 = vmatpush1.msra.mxu0 %v239
    %270 = vmatprep.subr.mxu0 0.0
    %271 = vmatpush1.msra.mxu0 %v240
    %272 = vmatprep.subr.mxu0 0.0
    %273 = vmatpush1.msra.mxu0 %v241
    %274 = vmatprep.subr.mxu0 0.0
    %275 = vmatpush1.msra.mxu0 %v242
    %276 = vmatprep.subr.mxu0 0.0
    %277 = vmatpush1.msra.mxu0 %v243
    %278 = vmatprep.subr.mxu0 0.0
    %279 = vmatpush1.msra.mxu0 %v244
    %280 = vmatprep.subr.mxu0 0.0
    %281 = vmatpush1.msra.mxu0 %v245
    %282 = vmatprep.subr.mxu0 0.0
    %283 = vmatpush1.msra.mxu0 %v246
    %284 = vmatprep.subr.mxu0 0.0
    %285 = vmatpush1.msra.mxu0 %v247
    %286 = vmatprep.subr.mxu0 0.0
    %287 = vmatpush1.msra.mxu0 %v248
    %288 = vmatprep.subr.mxu0 0.0
    %289 = vmatpush1.msra.mxu0 %v249
    %290 = vmatprep.subr.mxu0 0.0
    %291 = vmatpush1.msra.mxu0 0.0
    %292 = vmatprep.subr.mxu0 0.0
    %293 = vmatpush1.msra.mxu0 0.0
    %294 = vmatprep.subr.mxu0 0.0
    %295 = vmatpush1.msra.mxu0 0.0
    %296 = vmatprep.subr.mxu0 0.0
    %297 = vmatpush1.msra.mxu0 0.0
    %298 = vmatprep.subr.mxu0 0.0
    %299 = vmatpush1.msra.mxu0 0.0
    %300 = vmatprep.subr.mxu0 0.0
    %301 = vmatpush1.msra.mxu0 0.0
    %302 = vmatprep.subr.mxu0 0.0
    %303 = vmatpush1.msra.mxu0 0.0
    %304 = vmatprep.subr.mxu0 0.0
    %305 = vmatpush1.msra.mxu0 0.0
    %306 = vmatprep.subr.mxu0 0.0
    %307 = vmatpush1.msra.mxu0 0.0
    %308 = vmatprep.subr.mxu0 0.0
    %309 = vmatpush1.msra.mxu0 0.0
    %310 = vmatprep.subr.mxu0 0.0
    %311 = vmatpush1.msra.mxu0 0.0
    %312 = vmatprep.subr.mxu0 0.0
    %313 = vmatpush1.msra.mxu0 0.0
    %314 = vmatprep.subr.mxu0 0.0
    %315 = vmatpush1.msra.mxu0 0.0
    %316 = vmatprep.subr.mxu0 0.0
    %317 = vmatpush1.msra.mxu0 0.0
    %318 = vmatprep.subr.mxu0 0.0
    %319 = vmatpush1.msra.mxu0 0.0
    %320 = vmatprep.subr.mxu0 0.0
    %321 = vmatpush1.msra.mxu0 0.0
    %322 = vmatprep.mubr.f32.mxu0 0.0
    %323 = vmatmul.mubr.f32.gmra.mrb[0].mxu0 %v232
    %v324 = vpop.f32.mrb[0].mxu0
    %v325 = vadd.f32 %v256, %v324
    %v326 = vpop.f32.mrb[0].mxu0
    %327 = vdwg.mxu0
    %v328 = vtanh.pop %v325
    %s329 = scalar_lea.vmem [#allocation5], 384
    %v330 = vld [vmem:[%s329] sm:$0xff]
    %v331 = vld [vmem:[%s329 + $0x8] sm:$0xff]
    %v332 = vld [vmem:[%s329 + $0x10] sm:$0xff]
    %v333 = vld [vmem:[%s329 + $0x18] sm:$0xff]
    %v334 = vld [vmem:[%s329 + $0x20] sm:$0xff]
    %v335 = vld [vmem:[%s329 + $0x28] sm:$0xff]
    %v336 = vld [vmem:[%s329 + $0x30] sm:$0xff]
    %v337 = vld [vmem:[%s329 + $0x38] sm:$0xff]
    %v338 = vld [vmem:[%s329 + $0x40] sm:$0xff]
    %v339 = vld [vmem:[%s329 + $0x48] sm:$0xff]
    %v340 = vld [vmem:[%s329 + $0x50] sm:$0xff]
    %v341 = vld [vmem:[%s329 + $0x58] sm:$0xff]
    %v342 = vld [vmem:[%s329 + $0x60] sm:$0xff]
    %v343 = vld [vmem:[%s329 + $0x68] sm:$0xff]
    %v344 = vld [vmem:[%s329 + $0x70] sm:$0xff]
    %v345 = vld [vmem:[%s329 + $0x78] sm:$0xff]
    %s346 = scalar_lea.vmem %s2, 3
    %v347 = vld [vmem:[%s346] sm:$0x1]
    %v349 = vlaneseq
    %v350 = vshrl.u32 %v349, 7
    %v351 = vsub.s32 0, %v350
    %v352 = vrot.slane %v347, %v351
    %354 = vmatprep.subr.mxu0 0.0
    %355 = vmatpush1.msra.mxu0 %v330
    %356 = vmatprep.subr.mxu0 0.0
    %357 = vmatpush1.msra.mxu0 %v331
    %358 = vmatprep.subr.mxu0 0.0
    %359 = vmatpush1.msra.mxu0 %v332
    %360 = vmatprep.subr.mxu0 0.0
    %361 = vmatpush1.msra.mxu0 %v333
    %362 = vmatprep.subr.mxu0 0.0
    %363 = vmatpush1.msra.mxu0 %v334
    %364 = vmatprep.subr.mxu0 0.0
    %365 = vmatpush1.msra.mxu0 %v335
    %366 = vmatprep.subr.mxu0 0.0
    %367 = vmatpush1.msra.mxu0 %v336
    %368 = vmatprep.subr.mxu0 0.0
    %369 = vmatpush1.msra.mxu0 %v337
    %370 = vmatprep.subr.mxu0 0.0
    %371 = vmatpush1.msra.mxu0 %v338
    %372 = vmatprep.subr.mxu0 0.0
    %373 = vmatpush1.msra.mxu0 %v339
    %374 = vmatprep.subr.mxu0 0.0
    %375 = vmatpush1.msra.mxu0 %v340
    %376 = vmatprep.subr.mxu0 0.0
    %377 = vmatpush1.msra.mxu0 %v341
    %378 = vmatprep.subr.mxu0 0.0
    %379 = vmatpush1.msra.mxu0 %v342
    %380 = vmatprep.subr.mxu0 0.0
    %381 = vmatpush1.msra.mxu0 %v343
    %382 = vmatprep.subr.mxu0 0.0
    %383 = vmatpush1.msra.mxu0 %v344
    %384 = vmatprep.subr.mxu0 0.0
    %385 = vmatpush1.msra.mxu0 %v345
    %386 = vmatprep.subr.mxu0 0.0
    %387 = vmatpush1.msra.mxu0 0.0
    %388 = vmatprep.subr.mxu0 0.0
    %389 = vmatpush1.msra.mxu0 0.0
    %390 = vmatprep.subr.mxu0 0.0
    %391 = vmatpush1.msra.mxu0 0.0
    %392 = vmatprep.subr.mxu0 0.0
    %393 = vmatpush1.msra.mxu0 0.0
    %394 = vmatprep.subr.mxu0 0.0
    %395 = vmatpush1.msra.mxu0 0.0
    %396 = vmatprep.subr.mxu0 0.0
    %397 = vmatpush1.msra.mxu0 0.0
    %398 = vmatprep.subr.mxu0 0.0
    %399 = vmatpush1.msra.mxu0 0.0
    %400 = vmatprep.subr.mxu0 0.0
    %401 = vmatpush1.msra.mxu0 0.0
    %402 = vmatprep.subr.mxu0 0.0
    %403 = vmatpush1.msra.mxu0 0.0
    %404 = vmatprep.subr.mxu0 0.0
    %405 = vmatpush1.msra.mxu0 0.0
    %406 = vmatprep.subr.mxu0 0.0
    %407 = vmatpush1.msra.mxu0 0.0
    %408 = vmatprep.subr.mxu0 0.0
    %409 = vmatpush1.msra.mxu0 0.0
    %410 = vmatprep.subr.mxu0 0.0
    %411 = vmatpush1.msra.mxu0 0.0
    %412 = vmatprep.subr.mxu0 0.0
    %413 = vmatpush1.msra.mxu0 0.0
    %414 = vmatprep.subr.mxu0 0.0
    %415 = vmatpush1.msra.mxu0 0.0
    %416 = vmatprep.subr.mxu0 0.0
    %417 = vmatpush1.msra.mxu0 0.0
    %418 = vmatprep.mubr.f32.mxu0 0.0
    %419 = vmatmul.mubr.f32.gmra.mrb[0].mxu0 %v328
    %v420 = vpop.f32.mrb[0].mxu0
    %v421 = vadd.f32 %v352, %v420
    %v422 = vpop.f32.mrb[0].mxu0
    %423 = vdwg.mxu0
    %v424 = vtanh.pop %v421
    %v425 = vadd.f32 %v424, %v232
    %426 = vst [vmem:[#allocation7] sm:$0xf] %v425
    // Predicated region
    $region22: #{tpu_custom_call.1} parent=1 // pred_check
      _
    $region23: #{tpu_custom_call.1} parent=1 // pred_check_branch
      %428 = sbr.rel (0) target = $region25
    $region24: #{tpu_custom_call.1} parent=1 // pred_region
      %s430 = ssub.s32 64, 64
      %431 = vsyncadd [#allocation4], %s430
      %s433 = sshll.u32 [#allocation7], 4
      %s434 = int_to_ptr.vmem [resolvable:$true] %s433
      %436 = dma.vmem_to_hbm [thread:$0]  %s434, 64, %s3, [#allocation4]
    $region25: #{tpu_custom_call.1} parent=1 // pred_fallthru
      _
    // Predicated region
    $region26: #{tpu_custom_call.1} parent=1 // pred_check
      _
    $region27: #{tpu_custom_call.1} parent=1 // pred_check_branch
      %438 = sbr.rel (0) target = $region29
    $region28: #{tpu_custom_call.1} parent=1 // pred_region
      %439 = dma.done [#allocation4], 64
    $region29: #{tpu_custom_call.1} parent=1 // pred_fallthru
      _
    %440 = vsyncpa [#allocation3], 1
    %441 = vsyncpa [#allocation6], 1
    %442 = vsyncpa [#allocation4], 1

</llo_original>
